<compile_context>
chip_gen: v6e
topology: v6e:2x2x1
jax: 0.10.0
libtpu: 0.0.40
codegen_flags: <defaults>
</compile_context>

<pallas_src>
import jax
import jax.numpy as jnp
from jax.experimental import pallas as pl
from jax.experimental.pallas import tpu as pltpu

_MiB = 1024 * 1024
_LANE = 128
_SUBLANE = 8


# ----------------------------------------------------------------------- helpers
def _round_up(x, m):
    return -(-x // m) * m


def _vmem_capacity_bytes():
    """Physical VMEM of the current chip; conservative (v7x) fallback."""
    try:
        info = pltpu.get_tpu_info()
        cap = int(getattr(info, "vmem_capacity_bytes", 64 * _MiB))
        if cap > 0:
            return cap
    except Exception:
        pass
    return 64 * _MiB


def _block_vmem_bytes(tm, tk, tn, in_bytes):
    """Per-step VMEM: double-buffered A/G/C blocks + the f32 accumulator scratch."""
    return 2 * (tm * tk * in_bytes + tk * tn * in_bytes + tm * tn * 4) + tm * tn * 4


def _choose_tiles(M, K, N, batch, in_bytes, budget):
    """(8,128)-aligned tiles under the VMEM budget; >=2 parallel steps when possible."""
    tm = min(_round_up(M, _SUBLANE), 256)
    tk = min(_round_up(K, _LANE), 2048)
    tn = min(_round_up(N, _LANE), 512)

    while _block_vmem_bytes(tm, tk, tn, in_bytes) > budget:
        if tk > _LANE:
            tk = max(_LANE, _round_up(tk // 2, _LANE))
        elif tn > _LANE:
            tn = max(_LANE, _round_up(tn // 2, _LANE))
        elif tm > _SUBLANE:
            tm = max(_SUBLANE, _round_up(tm // 2, _SUBLANE))
        else:
            break

    # v7x has two TensorCores: ensure >= 2 steps along a "parallel" axis when we can.
    if batch * pl.cdiv(M, tm) * pl.cdiv(N, tn) < 2:
        if M >= 2 * _SUBLANE:
            tm = _round_up(-(-M // 2), _SUBLANE)
        elif N >= 2 * _LANE:
            tn = _round_up(-(-N // 2), _LANE)
    return tm, tk, tn


# ------------------------------------------------------------------------ kernel
def _tprod_matmul_kernel(a_ref, g_ref, o_ref, acc_ref):
    # a_ref: (1, tm, tk)  A tile (rows of A, flattened (n2, n3) contraction axis)
    # g_ref: (1, tk, tn)  block-circulant operator tile (flattened (n, n3) columns)
    # o_ref: (1, tm, tn)  lane-dense output tile
    # acc_ref: (tm, tn)   f32 accumulator, persistent across the K grid axis
    @pl.when(pl.program_id(3) == 0)
    def _init():
        acc_ref[...] = jnp.zeros_like(acc_ref)

    acc_ref[...] += jnp.dot(a_ref[0], g_ref[0], preferred_element_type=jnp.float32)

    @pl.when(pl.program_id(3) == pl.num_programs(3) - 1)
    def _store():
        o_ref[0] = acc_ref[...].astype(o_ref.dtype)


# ----------------------------------------------------------------------- wrapper
def tensor_product(A, B, *, compute_dtype=jnp.bfloat16):
    """Pallas TPU implementation of TensorProduct.forward(A, B)."""
    a_batched = A.ndim == 4
    b_batched = B.ndim == 4
    if A.ndim == 3:
        A = A[None]
    if B.ndim == 3:
        B = B[None]
    assert A.ndim == 4 and B.ndim == 4, "A, B must be 3-D or 4-D"

    ba, n1, n2, n3 = A.shape
    bb, n2b, n, n3b = B.shape
    assert n2 == n2b and n3 == n3b, "incompatible shapes for the t-product"
    assert ba == bb or ba == 1 or bb == 1, "incompatible batch sizes"
    b = max(ba, bb)

    A = A.astype(jnp.float32)
    B = B.astype(jnp.float32)

    # ---- block-circulant operator  G[(c, s), (l, t)] = B[c, l, (t - s) mod n3] ----
    t_idx = jnp.arange(n3, dtype=jnp.int32)
    shift = (t_idx[None, :] - t_idx[:, None]) % n3            # [s, t] -> (t - s) mod n3
    G = B[..., shift]                                         # (bb, n2, n, n3_s, n3_t)
    G = jnp.transpose(G, (0, 1, 3, 2, 4))                     # (bb, n2, n3_s, n, n3_t)
    G = G.reshape(bb, n2 * n3, n * n3)

    # ---- A in native layout; flattening the last two dims is a free reshape ----
    A2 = A.reshape(ba, n1, n2 * n3)

    M, K, N = n1, n2 * n3, n * n3
    in_bytes = jnp.dtype(compute_dtype).itemsize
    cap = _vmem_capacity_bytes()
    budget = max(16 * _MiB, min(int(0.55 * cap), cap - 24 * _MiB))
    tm, tk, tn = _choose_tiles(M, K, N, b, in_bytes, budget)

    Mp, Kp, Np = _round_up(M, tm), _round_up(K, tk), _round_up(N, tn)
    if (Mp, Kp) != (M, K):
        A2 = jnp.pad(A2, ((0, 0), (0, Mp - M), (0, Kp - K)))
    if (Kp, Np) != (K, N):
        G = jnp.pad(G, ((0, 0), (0, Kp - K), (0, Np - N)))

    # cast raw O(1) operands only; accumulation stays f32 inside the kernel
    A2 = A2.astype(compute_dtype)
    G = G.astype(compute_dtype)

    a_map = (lambda bi, i, j, k: (bi, i, k)) if ba > 1 else (lambda bi, i, j, k: (0, i, k))
    g_map = (lambda bi, i, j, k: (bi, k, j)) if bb > 1 else (lambda bi, i, j, k: (0, k, j))
    o_map = lambda bi, i, j, k: (bi, i, j)

    est = _block_vmem_bytes(tm, tk, tn, in_bytes)
    cp_kwargs = dict(
        dimension_semantics=("parallel", "parallel", "parallel", "arbitrary"))
    if est > 12 * _MiB:
        cp_kwargs["vmem_limit_bytes"] = int(min(cap - 12 * _MiB, max(32 * _MiB, 2 * est)))

    out = pl.pallas_call(
        _tprod_matmul_kernel,
        out_shape=jax.ShapeDtypeStruct((b, Mp, Np), jnp.float32),
        grid_spec=pltpu.PrefetchScalarGridSpec(
            num_scalar_prefetch=0,
            grid=(b, Mp // tm, Np // tn, Kp // tk),
            in_specs=[
                pl.BlockSpec((1, tm, tk), a_map),
                pl.BlockSpec((1, tk, tn), g_map),
            ],
            out_specs=pl.BlockSpec((1, tm, tn), o_map),
            scratch_shapes=[pltpu.VMEM((tm, tn), jnp.float32)],
        ),
        compiler_params=pltpu.CompilerParams(**cp_kwargs),
    )(A2, G)

    out = out[:, :M, :N].reshape(b, n1, n, n3)   # free reshape back to (b, n1, n, n3)
    if not (a_batched or b_batched):
        out = out[0]
    return out


# --------------------------------------------------------------------- reference
def _reference_tensor_product(A, B):
    """Pure-JAX reference matching the PyTorch module exactly."""
    Ah = jnp.fft.fft(A, axis=-1)
    Bh = jnp.fft.fft(B, axis=-1)
    Ch = jnp.einsum("...ipk,...pjk->...ijk", Ah, Bh)
    C = jnp.fft.ifft(Ch, axis=-1)
    return jnp.real(C).astype(jnp.float32)


if __name__ == "__main__":
    key = jax.random.PRNGKey(0)
    k1, k2 = jax.random.split(key)

    # small shapes: batch=2, n1=8, n2=16, n=8, tube length n3=8
    A = jax.random.normal(k1, (2, 8, 16, 8), dtype=jnp.float32)
    B = jax.random.normal(k2, (2, 16, 8, 8), dtype=jnp.float32)

    ref = jax.block_until_ready(_reference_tensor_product(A, B))

    # exact path (f32 MXU matmul) -- tight elementwise check
    out32 = jax.block_until_ready(tensor_product(A, B, compute_dtype=jnp.float32))
    assert out32.shape == ref.shape == (2, 8, 8, 8)
    assert jnp.allclose(out32, ref, atol=1e-2, rtol=1e-2), "f32 mismatch vs reference"

    # default fast path (bf16 MXU operands, f32 accumulation) -- relative-norm check
    out16 = jax.block_until_ready(tensor_product(A, B))
    assert out16.shape == ref.shape
    rel = jnp.sqrt(jnp.sum((out16 - ref) ** 2)) / jnp.sqrt(jnp.sum(ref ** 2))
    assert float(rel) < 5e-2, f"bf16 relative error too large: {float(rel)}"

    # batchless (3-D) code path
    out3 = jax.block_until_ready(tensor_product(A[0], B[0], compute_dtype=jnp.float32))
    ref3 = jax.block_until_ready(_reference_tensor_product(A[0], B[0]))
    assert out3.shape == (8, 8, 8)
    assert jnp.allclose(out3, ref3, atol=1e-2, rtol=1e-2), "3-D mismatch vs reference"

    print("KERNEL_OK")
</pallas_src>

<mosaic_0001>
module attributes {stable_mosaic.version = 11 : i64} {
  func.func @_tprod_matmul_kernel(%arg0: i32, %arg1: i32, %arg2: i32, %arg3: i32, %arg4: memref<1x8x128xf32, #tpu.memory_space<vmem>>, %arg5: memref<1x128x128xf32, #tpu.memory_space<vmem>>, %arg6: memref<1x8x128xf32, #tpu.memory_space<vmem>>, %arg7: memref<8x128xf32, #tpu.memory_space<vmem>>) attributes {dimension_semantics = [#tpu.dimension_semantics<parallel>, #tpu.dimension_semantics<parallel>, #tpu.dimension_semantics<parallel>, #tpu.dimension_semantics<arbitrary>], iteration_bounds = array<i64: 2, 1, 1, 1>, scalar_prefetch = 0 : i64, scratch_operands = 1 : i64, tpu.core_type = #tpu.core_type<tc>, window_params = [{transform_indices = @transform_0, window_bounds = array<i64: 1, 8, 128>}, {transform_indices = @transform_1, window_bounds = array<i64: 1, 128, 128>}, {transform_indices = @transform_2, window_bounds = array<i64: 1, 8, 128>}]} {
    %c0_i32 = arith.constant 0 : i32
    %0 = arith.cmpi eq, %arg3, %c0_i32 : i32
    %1 = arith.extui %0 : i1 to i32
    %c0_i32_0 = arith.constant 0 : i32
    %2 = arith.cmpi ne, %1, %c0_i32_0 : i32
    scf.if %2 {
      %cst_12 = arith.constant 0.000000e+00 : f32
      %14 = vector.broadcast %cst_12 : f32 to vector<8x128xf32>
      %c0_13 = arith.constant 0 : index
      %c0_14 = arith.constant 0 : index
      %15 = vector.load %arg7[%c0_13, %c0_14] : memref<8x128xf32, #tpu.memory_space<vmem>>, vector<8x128xf32>
      tpu.vector_store %arg7[%c0_13, %c0_14], %14 {strides = array<i32>} : memref<8x128xf32, #tpu.memory_space<vmem>>, vector<8x128xf32>,
    } else {
    }
    %c0 = arith.constant 0 : index
    %c0_1 = arith.constant 0 : index
    %3 = vector.load %arg7[%c0, %c0_1] : memref<8x128xf32, #tpu.memory_space<vmem>>, vector<8x128xf32>
    %c0_2 = arith.constant 0 : index
    %c0_3 = arith.constant 0 : index
    %c0_4 = arith.constant 0 : index
    %4 = vector.load %arg4[%c0_2, %c0_3, %c0_4] : memref<1x8x128xf32, #tpu.memory_space<vmem>>, vector<1x8x128xf32>
    %5 = vector.shape_cast %4 : vector<1x8x128xf32> to vector<8x128xf32>
    %c0_5 = arith.constant 0 : index
    %c0_6 = arith.constant 0 : index
    %c0_7 = arith.constant 0 : index
    %6 = vector.load %arg5[%c0_5, %c0_6, %c0_7] : memref<1x128x128xf32, #tpu.memory_space<vmem>>, vector<1x128x128xf32>
    %7 = vector.shape_cast %6 : vector<1x128x128xf32> to vector<128x128xf32>
    %cst = arith.constant dense<0.000000e+00> : vector<8x128xf32>
    %8 = tpu.matmul %5, %7, %cst {dimension_numbers = #tpu.dot_dimension_numbers<[1], [0], [0], [1], [0, 0, 1, 1], [], []>} : vector<8x128xf32>, vector<128x128xf32>, vector<8x128xf32> -> vector<8x128xf32>
    %9 = arith.addf %3, %8 : vector<8x128xf32>
    %c0_8 = arith.constant 0 : index
    %c0_9 = arith.constant 0 : index
    %10 = vector.load %arg7[%c0_8, %c0_9] : memref<8x128xf32, #tpu.memory_space<vmem>>, vector<8x128xf32>
    tpu.vector_store %arg7[%c0_8, %c0_9], %9 {strides = array<i32>} : memref<8x128xf32, #tpu.memory_space<vmem>>, vector<8x128xf32>,
    %c0_i32_10 = arith.constant 0 : i32
    %11 = arith.cmpi eq, %arg3, %c0_i32_10 : i32
    %12 = arith.extui %11 : i1 to i32
    %c0_i32_11 = arith.constant 0 : i32
    %13 = arith.cmpi ne, %12, %c0_i32_11 : i32
    scf.if %13 {
      %c0_12 = arith.constant 0 : index
      %c0_13 = arith.constant 0 : index
      %14 = vector.load %arg7[%c0_12, %c0_13] : memref<8x128xf32, #tpu.memory_space<vmem>>, vector<8x128xf32>
      %c0_14 = arith.constant 0 : index
      %c0_15 = arith.constant 0 : index
      %c0_16 = arith.constant 0 : index
      %15 = vector.load %arg6[%c0_14, %c0_15, %c0_16] : memref<1x8x128xf32, #tpu.memory_space<vmem>>, vector<1x8x128xf32>
      %16 = vector.shape_cast %15 : vector<1x8x128xf32> to vector<8x128xf32>
      %17 = vector.shape_cast %14 : vector<8x128xf32> to vector<1x8x128xf32>
      tpu.vector_store %arg6[%c0_14, %c0_15, %c0_16], %17 {strides = array<i32>} : memref<1x8x128xf32, #tpu.memory_space<vmem>>, vector<1x8x128xf32>,
    } else {
    }
    return
  }
  func.func @transform_0(%arg0: i32, %arg1: i32, %arg2: i32, %arg3: i32) -> (i32, i32, i32) {
    %c0_i32 = arith.constant 0 : i32
    return %arg0, %arg1, %arg3 : i32, i32, i32
  }
  func.func @transform_1(%arg0: i32, %arg1: i32, %arg2: i32, %arg3: i32) -> (i32, i32, i32) {
    %c0_i32 = arith.constant 0 : i32
    return %arg0, %arg3, %arg2 : i32, i32, i32
  }
  func.func @transform_2(%arg0: i32, %arg1: i32, %arg2: i32, %arg3: i32) -> (i32, i32, i32) {
    %c0_i32 = arith.constant 0 : i32
    return %arg0, %arg1, %arg2 : i32, i32, i32
  }
}

</mosaic_0001>

<llo_original>
// kernel: tpu_custom_call.1
$region0: #{tpu_custom_call.1}
  #allocation0 [shape = 'u32[]', space=smem, size = 0x4, offset = 0x4, fixed_abs, tag = 'smem constant byte address 0x4 - core index']
  #allocation1 [shape = 'u32[144,128]{1,0:T(1,128)}', space=vmem, size = 0x12000, scoped, tag = 'internal scratch']
  #allocation2 [shape = 'f32[8,128]{1,0:T(8,128)}', space=vmem, size = 0x1000, scoped, tag = 'scratch operand']
  %s0 = inlined_call_operand.hbm [shape: f32[2,8,128], index: 0, kind: input, shape index: {}]
  %s1 = inlined_call_operand.hbm [shape: f32[2,128,128], index: 1, kind: input, shape index: {}]
  %s2 = inlined_call_operand.hbm [shape: f32[2,8,128], index: 2, kind: output, shape index: {}]
  %s3 = sld [smem:[#allocation0]]
  $region57: #{tpu_custom_call.1} parent=0
    _
  %s5 = ssub.s32 1, %s3
  %s6 = scalar_select 0, %s5, %s3
  $region1: #{tpu_custom_call.1} parent=0
    #allocation3 [shape = 'u8[8192]{0}', space=vmem, size = 0x2000, scoped, tag = 'input window, operand 0']
    #allocation4 [shape = 's32[2]{0}', space=sflag, size = 0x8, scoped, tag = 'scoped memory for tpu_custom_call.1']
    #allocation5 [shape = 's32[2]{0}', space=sflag, size = 0x8, scoped, tag = 'scoped memory for tpu_custom_call.1']
    #allocation6 [shape = 'u8[131072]{0}', space=vmem, size = 0x20000, scoped, tag = 'input window, operand 1']
    #allocation7 [shape = 's32[2]{0}', space=sflag, size = 0x8, scoped, tag = 'scoped memory for tpu_custom_call.1']
    #allocation8 [shape = 'u8[8192]{0}', space=vmem, size = 0x2000, scoped, tag = 'output window, operand 0']
    %7 = vsyncpa [#allocation4], 0
    %s8 = scalar_lea.sflag [#allocation4], 1
    %9 = vsyncpa %s8, 0
    %10 = vsyncpa [#allocation7], 0
    %s11 = scalar_lea.sflag [#allocation7], 1
    %12 = vsyncpa %s11, 0
    %13 = vsyncpa [#allocation5], 0
    %s14 = scalar_lea.sflag [#allocation5], 1
    %15 = vsyncpa %s14, 0
    loop: start=0, step=1, limit=4
    $region2: #{tpu_custom_call.1} parent=1 // loop_pre_header
      _
    $region3: #{tpu_custom_call.1} parent=1 // loop_header
      %s17 = sphi 0, %s21
      %p18 = scmp.ge.s32.totalorder %s17, 4
      %s24 = sphi 0, %s50
      %s25 = sphi 0, %s46
      %s26 = sphi 0, %s42
      %s27 = sphi 0, %s38
      %s28 = sphi 0, %s24
      %s29 = sphi 0, %s25
      %s30 = sphi 0, %s26
      %s31 = sphi 0, %s27
      %s32 = sphi 0, %s28
      %s33 = sphi 0, %s29
      %s34 = sphi 0, %s30
      %s35 = sphi 0, %s31
      %s57 = sphi 0, %s59
      %s60 = sphi 0, %s57
      %s61 = sphi 0, %s60
      %s77 = sphi 0, %s61
      %s87 = sphi 0, %s89
      %s90 = sphi 0, %s87
      %s91 = sphi 0, %s90
      %s107 = sphi 0, %s91
      %s117 = sphi 0, %s119
      %s120 = sphi 0, %s117
      %s121 = sphi 0, %s120
      %s137 = sphi 0, %s121
    $region4: #{tpu_custom_call.1} parent=1 // loop_header_branch
      %20 = sbr.rel (%p18) target = $region8
    $region5: #{tpu_custom_call.1} parent=1 // loop_body
      %s22 = ssub.s32 %s17, 1
      %s23 = ssub.s32 %s17, 2
      %s36 = sadd.s32 1, %s27
      %p37 = scmp.ge.s32.totalorder %s36, 1
      %s38 = scalar_select %p37, 0, %s36
      %s39 = sadd.s32 1, %s26
      %s40 = scalar_select %p37, %s39, %s26
      %p41 = scmp.ge.s32.totalorder %s40, 1
      %s42 = scalar_select %p41, 0, %s40
      %s43 = sadd.s32 1, %s25
      %s44 = scalar_select %p41, %s43, %s25
      %p45 = scmp.ge.s32.totalorder %s44, 1
      %s46 = scalar_select %p45, 0, %s44
      %s47 = sadd.s32 1, %s24
      %s48 = scalar_select %p45, %s47, %s24
      %p49 = scmp.ge.s32.totalorder %s48, 2
      %s50 = scalar_select %p49, 0, %s48
      %s51 = ssub.s32 %s24, %s50
      %s52 = ssub.s32 %s25, %s46
      %s53 = sor.u32 %s51, %s52
      %s54 = ssub.s32 %s27, %s38
      %s55 = sor.u32 %s53, %s54
      %p56 = scmp.eq.s32.totalorder %s55, 0
      %s58 = sadd.s32 %s57, 1
      %s59 = scalar_select %p56, %s57, %s58
      %p62 = pneg %p56
      %p63 = scmp.eq.s32.totalorder %s17, 1
      %p64 = por %p62, %p63
      %p65 = scmp.ne.s32.totalorder %s57, %s60
      %p66 = scmp.eq.s32.totalorder %s17, 0
      %p67 = por %p65, %p66
      %p68 = scmp.ne.s32.totalorder %s57, %s60
      %p69 = scmp.eq.s32.totalorder %s22, 1
      %p70 = por %p68, %p69
      %p71 = scmp.ne.s32.totalorder %s60, %s61
      %p72 = scmp.eq.s32.totalorder %s22, 0
      %p73 = por %p71, %p72
      %p74 = scmp.ne.s32.totalorder %s60, %s61
      %p75 = scmp.eq.s32.totalorder %s23, 1
      %p76 = por %p74, %p75
      %p78 = scmp.ne.s32.totalorder %s61, %s77
      %p79 = scmp.eq.s32.totalorder %s23, 0
      %p80 = por %p78, %p79
      %s81 = ssub.s32 %s24, %s50
      %s82 = ssub.s32 %s27, %s38
      %s83 = sor.u32 %s81, %s82
      %s84 = ssub.s32 %s26, %s42
      %s85 = sor.u32 %s83, %s84
      %p86 = scmp.eq.s32.totalorder %s85, 0
      %s88 = sadd.s32 %s87, 1
      %s89 = scalar_select %p86, %s87, %s88
      %p92 = pneg %p86
      %p93 = scmp.eq.s32.totalorder %s17, 1
      %p94 = por %p92, %p93
      %p95 = scmp.ne.s32.totalorder %s87, %s90
      %p96 = scmp.eq.s32.totalorder %s17, 0
      %p97 = por %p95, %p96
      %p98 = scmp.ne.s32.totalorder %s87, %s90
      %p99 = scmp.eq.s32.totalorder %s22, 1
      %p100 = por %p98, %p99
      %p101 = scmp.ne.s32.totalorder %s90, %s91
      %p102 = scmp.eq.s32.totalorder %s22, 0
      %p103 = por %p101, %p102
      %p104 = scmp.ne.s32.totalorder %s90, %s91
      %p105 = scmp.eq.s32.totalorder %s23, 1
      %p106 = por %p104, %p105
      %p108 = scmp.ne.s32.totalorder %s91, %s107
      %p109 = scmp.eq.s32.totalorder %s23, 0
      %p110 = por %p108, %p109
      %s111 = ssub.s32 %s24, %s50
      %s112 = ssub.s32 %s25, %s46
      %s113 = sor.u32 %s111, %s112
      %s114 = ssub.s32 %s26, %s42
      %s115 = sor.u32 %s113, %s114
      %p116 = scmp.eq.s32.totalorder %s115, 0
      %s118 = sadd.s32 %s117, 1
      %s119 = scalar_select %p116, %s117, %s118
      %p122 = pneg %p116
      %p123 = scmp.eq.s32.totalorder %s17, 1
      %p124 = por %p122, %p123
      %p125 = scmp.ne.s32.totalorder %s117, %s120
      %p126 = scmp.eq.s32.totalorder %s17, 0
      %p127 = por %p125, %p126
      %p128 = scmp.ne.s32.totalorder %s117, %s120
      %p129 = scmp.eq.s32.totalorder %s22, 1
      %p130 = por %p128, %p129
      %p131 = scmp.ne.s32.totalorder %s120, %s121
      %p132 = scmp.eq.s32.totalorder %s22, 0
      %p133 = por %p131, %p132
      %p134 = scmp.ne.s32.totalorder %s120, %s121
      %p135 = scmp.eq.s32.totalorder %s23, 1
      %p136 = por %p134, %p135
      %p138 = scmp.ne.s32.totalorder %s121, %s137
      %p139 = scmp.eq.s32.totalorder %s23, 0
      %p140 = por %p138, %p139
      %p141 = scmp.le.s32.totalorder 1, %s17
      %p142 = scmp.lt.s32.totalorder %s17, 3
      %p143 = pnand %p141, %p142
      %p144 = pneg %p143
      // Predicated region
      $region9: #{tpu_custom_call.1} parent=5 // pred_check
        _
      $region10: #{tpu_custom_call.1} parent=5 // pred_check_branch
        %146 = sbr.rel (%p143) target = $region12
      $region11: #{tpu_custom_call.1} parent=5 // pred_region
        %s147 = ssub.s32 %s17, 1
      $region12: #{tpu_custom_call.1} parent=5 // pred_fallthru
        _
      %p148 = scmp.lt.s32.totalorder %s17, 2
      // Predicated region
      $region13: #{tpu_custom_call.1} parent=5 // pred_check
        %p149 = pneg %p148
      $region14: #{tpu_custom_call.1} parent=5 // pred_check_branch
        %151 = sbr.rel (%p149) target = $region16
      $region15: #{tpu_custom_call.1} parent=5 // pred_region
        // Predicated region
        $region17: #{tpu_custom_call.1} parent=15 // pred_check
          %p152 = pneg %p67
        $region18: #{tpu_custom_call.1} parent=15 // pred_check_branch
          %154 = sbr.rel (%p152) target = $region20
        $region19: #{tpu_custom_call.1} parent=15 // pred_region
          %s155 = sand.u32 %s57, 1
          %s156 = scalar_lea.sflag [#allocation4], %s155
          %s157 = sand.u32 %s57, 1
          %s158 = smul.addr %s157, 8
          %s159 = scalar_lea.vmem [#allocation3], %s158
          %s161 = ssub.s32 128, 128
          %162 = vsyncadd %s156, %s161
          %s163 = sadd.s32 %s27, %s25
          %s164 = sadd.s32 %s163, %s24
          %s165 = smul.addr %s164, 128
          %s166 = scalar_lea.hbm %s0, %s165
          %s168 = sshll.u32 %s159, 4
          %s169 = int_to_ptr.vmem [resolvable:$true] %s168
          %171 = dma.hbm_to_vmem [thread:$0]  %s166, 128, %s169, %s156
        $region20: #{tpu_custom_call.1} parent=15 // pred_fallthru
          _
        // Predicated region
        $region21: #{tpu_custom_call.1} parent=15 // pred_check
          %p172 = pneg %p97
        $region22: #{tpu_custom_call.1} parent=15 // pred_check_branch
          %174 = sbr.rel (%p172) target = $region24
        $region23: #{tpu_custom_call.1} parent=15 // pred_region
          %s175 = sand.u32 %s87, 1
          %s176 = scalar_lea.sflag [#allocation7], %s175
          %s177 = sand.u32 %s87, 1
          %s178 = smul.addr %s177, 128
          %s179 = scalar_lea.vmem [#allocation6], %s178
          %s180 = smul.u32 16, %s27
          %s182 = ssub.s32 2048, 2048
          %183 = vsyncadd %s176, %s182
          %s184 = sadd.s32 %s26, %s180
          %s185 = smul.addr %s24, 16
          %s186 = sadd.s32 %s184, %s185
          %s187 = smul.addr %s186, 128
          %s188 = scalar_lea.hbm %s1, %s187
          %s189 = sshll.u32 %s179, 4
          %s190 = int_to_ptr.vmem [resolvable:$true] %s189
          %195 = dma.hbm_to_vmem [thread:$0]  %s188, 2048, %s190, %s176, 128, 128, 8
        $region24: #{tpu_custom_call.1} parent=15 // pred_fallthru
          _
      $region16: #{tpu_custom_call.1} parent=5 // pred_fallthru
        _
      %p196 = scmp.le.s32.totalorder 1, %s17
      %p197 = scmp.lt.s32.totalorder %s17, 3
      %p198 = pnand %p196, %p197
      %p199 = pneg %p198
      // Predicated region
      $region25: #{tpu_custom_call.1} parent=5 // pred_check
        _
      $region26: #{tpu_custom_call.1} parent=5 // pred_check_branch
        %201 = sbr.rel (%p198) target = $region28
      $region27: #{tpu_custom_call.1} parent=5 // pred_region
        %s202 = ssub.s32 %s17, 1
        %s203 = sand.u32 %s60, 1
        %s204 = scalar_lea.sflag [#allocation4], %s203
        %s205 = sand.u32 %s60, 1
        %s206 = smul.addr %s205, 8
        %s207 = scalar_lea.vmem [#allocation3], %s206
        // Predicated region
        $region29: #{tpu_custom_call.1} parent=27 // pred_check
          %p208 = pneg %p73
        $region30: #{tpu_custom_call.1} parent=27 // pred_check_branch
          %210 = sbr.rel (%p208) target = $region32
        $region31: #{tpu_custom_call.1} parent=27 // pred_region
          %211 = dma.done %s204, 128
        $region32: #{tpu_custom_call.1} parent=27 // pred_fallthru
          _
        %s212 = sand.u32 %s90, 1
        %s213 = scalar_lea.sflag [#allocation7], %s212
        %s214 = sand.u32 %s90, 1
        %s215 = smul.addr %s214, 128
        %s216 = scalar_lea.vmem [#allocation6], %s215
        // Predicated region
        $region33: #{tpu_custom_call.1} parent=27 // pred_check
          %p217 = pneg %p103
        $region34: #{tpu_custom_call.1} parent=27 // pred_check_branch
          %219 = sbr.rel (%p217) target = $region36
        $region35: #{tpu_custom_call.1} parent=27 // pred_region
          %220 = dma.done %s213, 2048
        $region36: #{tpu_custom_call.1} parent=27 // pred_fallthru
          _
        %s221 = sand.u32 %s60, 1
        %s222 = scalar_lea.sflag [#allocation4], %s221
        %s223 = sand.u32 %s60, 1
        %s224 = smul.addr %s223, 8
        %s225 = scalar_lea.vmem [#allocation3], %s224
        %p226 = pneg %p73
        %p227 = pneg %p70
        %s228 = sand.u32 %s90, 1
        %s229 = scalar_lea.sflag [#allocation7], %s228
        %s230 = sand.u32 %s90, 1
        %s231 = smul.addr %s230, 128
        %s232 = scalar_lea.vmem [#allocation6], %s231
        %p233 = pneg %p103
        %p234 = pneg %p100
        %p235 = pneg %p133
        %p236 = pneg %p130
        %s237 = sand.u32 %s120, 1
        %s238 = scalar_lea.sflag [#allocation5], %s237
        %s239 = sand.u32 %s120, 1
        %s240 = smul.addr %s239, 8
        %s241 = scalar_lea.vmem [#allocation8], %s240
        %s242 = smul.u32 16, %s31
        %p243 = scmp.eq.s32.totalorder %s31, 0
        // Predicated region
        $region37: #{tpu_custom_call.1} parent=27 // pred_check
          %p244 = pneg %p243
        $region38: #{tpu_custom_call.1} parent=27 // pred_check_branch
          %246 = sbr.rel (%p244) target = $region40
        $region39: #{tpu_custom_call.1} parent=27 // pred_region
          %247 = vst [vmem:[#allocation2] sm:$0xff] 0.0
        $region40: #{tpu_custom_call.1} parent=27 // pred_fallthru
          _
        %v248 = vld [vmem:[#allocation2] sm:$0xff]
        %v249 = vld [vmem:[%s207] sm:$0xff]
        %v250 = vld [vmem:[%s216] sm:$0xff]
        %v251 = vld [vmem:[%s216 + $0x8] sm:$0xff]
        %v252 = vld [vmem:[%s216 + $0x10] sm:$0xff]
        %v253 = vld [vmem:[%s216 + $0x18] sm:$0xff]
        %v254 = vld [vmem:[%s216 + $0x20] sm:$0xff]
        %v255 = vld [vmem:[%s216 + $0x28] sm:$0xff]
        %v256 = vld [vmem:[%s216 + $0x30] sm:$0xff]
        %v257 = vld [vmem:[%s216 + $0x38] sm:$0xff]
        %v258 = vld [vmem:[%s216 + $0x40] sm:$0xff]
        %v259 = vld [vmem:[%s216 + $0x48] sm:$0xff]
        %v260 = vld [vmem:[%s216 + $0x50] sm:$0xff]
        %v261 = vld [vmem:[%s216 + $0x58] sm:$0xff]
        %v262 = vld [vmem:[%s216 + $0x60] sm:$0xff]
        %v263 = vld [vmem:[%s216 + $0x68] sm:$0xff]
        %v264 = vld [vmem:[%s216 + $0x70] sm:$0xff]
        %v265 = vld [vmem:[%s216 + $0x78] sm:$0xff]
        %266 = vmatprep.subr.mxu0 0.0
        %267 = vmatpush1.msra.mxu0 %v265
        %268 = vmatprep.subr.mxu0 0.0
        %269 = vmatpush1.msra.mxu0 %v264
        %270 = vmatprep.subr.mxu0 0.0
        %271 = vmatpush1.msra.mxu0 %v263
        %272 = vmatprep.subr.mxu0 0.0
        %273 = vmatpush1.msra.mxu0 %v262
        %274 = vmatprep.subr.mxu0 0.0
        %275 = vmatpush1.msra.mxu0 %v261
        %276 = vmatprep.subr.mxu0 0.0
        %277 = vmatpush1.msra.mxu0 %v260
        %278 = vmatprep.subr.mxu0 0.0
        %279 = vmatpush1.msra.mxu0 %v259
        %280 = vmatprep.subr.mxu0 0.0
        %281 = vmatpush1.msra.mxu0 %v258
        %282 = vmatprep.subr.mxu0 0.0
        %283 = vmatpush1.msra.mxu0 %v257
        %284 = vmatprep.subr.mxu0 0.0
        %285 = vmatpush1.msra.mxu0 %v256
        %286 = vmatprep.subr.mxu0 0.0
        %287 = vmatpush1.msra.mxu0 %v255
        %288 = vmatprep.subr.mxu0 0.0
        %289 = vmatpush1.msra.mxu0 %v254
        %290 = vmatprep.subr.mxu0 0.0
        %291 = vmatpush1.msra.mxu0 %v253
        %292 = vmatprep.subr.mxu0 0.0
        %293 = vmatpush1.msra.mxu0 %v252
        %294 = vmatprep.subr.mxu0 0.0
        %295 = vmatpush1.msra.mxu0 %v251
        %296 = vmatprep.subr.mxu0 0.0
        %297 = vmatpush1.msra.mxu0 %v250
        %298 = vmatprep.subr.mxu0 0.0
        %299 = vmatpush2.msra.mxu0 0.0
        %300 = vmatprep.subr.mxu0 0.0
        %301 = vmatpush2.msra.mxu0 0.0
        %302 = vmatprep.subr.mxu0 0.0
        %303 = vmatpush2.msra.mxu0 0.0
        %304 = vmatprep.subr.mxu0 0.0
        %305 = vmatpush2.msra.mxu0 0.0
        %306 = vmatprep.subr.mxu0 0.0
        %307 = vmatpush2.msra.mxu0 0.0
        %308 = vmatprep.subr.mxu0 0.0
        %309 = vmatpush2.msra.mxu0 0.0
        %310 = vmatprep.subr.mxu0 0.0
        %311 = vmatpush2.msra.mxu0 0.0
        %312 = vmatprep.subr.mxu0 0.0
        %313 = vmatpush2.msra.mxu0 0.0
        %314 = vmatprep.subr.mxu0 0.0
        %315 = vmatpush2.msra.mxu0 0.0
        %316 = vmatprep.subr.mxu0 0.0
        %317 = vmatpush2.msra.mxu0 0.0
        %318 = vmatprep.subr.mxu0 0.0
        %319 = vmatpush2.msra.mxu0 0.0
        %320 = vmatprep.subr.mxu0 0.0
        %321 = vmatpush2.msra.mxu0 0.0
        %322 = vmatprep.subr.mxu0 0.0
        %323 = vmatpush2.msra.mxu0 0.0
        %324 = vmatprep.subr.mxu0 0.0
        %325 = vmatpush2.msra.mxu0 0.0
        %326 = vmatprep.subr.mxu0 0.0
        %327 = vmatpush2.msra.mxu0 0.0
        %328 = vmatprep.subr.mxu0 0.0
        %329 = vmatpush2.msra.mxu0 0.0
        %330 = vmatprep.mubr.f32.mxu0 0.0
        %331 = vmatmul.mubr.f32.gmra.mxu0 %v249
        %v332 = vpop.f32.mrf.mxu0
        %v333 = vadd.f32 0.0, %v332
        %v334 = vpop.f32.mrf.mxu0
        %335 = vdwg.mxu0
        %v336 = vadd.f32 %v248, %v333
        %337 = vst [vmem:[#allocation2] sm:$0xff] %v336
        // Predicated region
        $region41: #{tpu_custom_call.1} parent=27 // pred_check
          %p338 = pneg %p243
        $region42: #{tpu_custom_call.1} parent=27 // pred_check_branch
          %340 = sbr.rel (%p338) target = $region44
        $region43: #{tpu_custom_call.1} parent=27 // pred_region
          %v341 = vld [vmem:[#allocation2] sm:$0xff]
          %342 = vst [vmem:[%s241] sm:$0xff] %v341
        $region44: #{tpu_custom_call.1} parent=27 // pred_fallthru
          _
        %s343 = sand.u32 %s120, 1
        %s344 = scalar_lea.sflag [#allocation5], %s343
        %s345 = sand.u32 %s120, 1
        %s346 = smul.addr %s345, 8
        %s347 = scalar_lea.vmem [#allocation8], %s346
        // Predicated region
        $region45: #{tpu_custom_call.1} parent=27 // pred_check
          %p348 = pneg %p130
        $region46: #{tpu_custom_call.1} parent=27 // pred_check_branch
          %350 = sbr.rel (%p348) target = $region48
        $region47: #{tpu_custom_call.1} parent=27 // pred_region
          %s352 = ssub.s32 128, 128
          %353 = vsyncadd %s344, %s352
          %s354 = sadd.s32 %s30, %s29
          %s355 = sadd.s32 %s354, %s28
          %s356 = smul.addr %s355, 128
          %s357 = scalar_lea.hbm %s2, %s356
          %s359 = sshll.u32 %s347, 4
          %s360 = int_to_ptr.vmem [resolvable:$true] %s359
          %362 = dma.vmem_to_hbm [thread:$0]  %s360, 128, %s357, %s344
        $region48: #{tpu_custom_call.1} parent=27 // pred_fallthru
          _
      $region28: #{tpu_custom_call.1} parent=5 // pred_fallthru
        _
      %p363 = scmp.le.s32.totalorder 2, %s17
      // Predicated region
      $region49: #{tpu_custom_call.1} parent=5 // pred_check
        %p364 = pneg %p363
      $region50: #{tpu_custom_call.1} parent=5 // pred_check_branch
        %366 = sbr.rel (%p364) target = $region52
      $region51: #{tpu_custom_call.1} parent=5 // pred_region
        %s367 = ssub.s32 %s17, 2
        // Predicated region
        $region53: #{tpu_custom_call.1} parent=51 // pred_check
          %p368 = pneg %p136
        $region54: #{tpu_custom_call.1} parent=51 // pred_check_branch
          %370 = sbr.rel (%p368) target = $region56
        $region55: #{tpu_custom_call.1} parent=51 // pred_region
          %s371 = sand.u32 %s121, 1
          %s372 = scalar_lea.sflag [#allocation5], %s371
          %s373 = sand.u32 %s121, 1
          %s374 = smul.addr %s373, 8
          %s375 = scalar_lea.vmem [#allocation8], %s374
          %376 = dma.done %s372, 128
        $region56: #{tpu_custom_call.1} parent=51 // pred_fallthru
          _
      $region52: #{tpu_custom_call.1} parent=5 // pred_fallthru
        _
    $region6: #{tpu_custom_call.1} parent=1 // loop_footer
      %s21 = sadd.s32 1, %s17
    $region7: #{tpu_custom_call.1} parent=1 // loop_footer_branch
      %16 = sbr.rel target = $region3
    $region8: #{tpu_custom_call.1} parent=1 // loop_exit
      _
    %377 = vsyncpa [#allocation4], 1
    %s378 = scalar_lea.sflag [#allocation4], 1
    %379 = vsyncpa %s378, 1
    %380 = vsyncpa [#allocation7], 1
    %s381 = scalar_lea.sflag [#allocation7], 1
    %382 = vsyncpa %s381, 1
    %383 = vsyncpa [#allocation5], 1
    %s384 = scalar_lea.sflag [#allocation5], 1
    %385 = vsyncpa %s384, 1

</llo_original>
